<compile_context>
chip_gen: v5e
topology: v5e:2x2
jax: 0.10.0
libtpu: 0.0.40
codegen_flags: <defaults>
</compile_context>

<pallas_src>
import math
import functools

import jax
import jax.numpy as jnp
from jax.experimental import pallas as pl
from jax.experimental.pallas import tpu as pltpu


def _round_up(x, m):
    return ((x + m - 1) // m) * m


def _apply_activation(name, x):
    if name == "relu":
        return jnp.maximum(x, 0.0)
    elif name == "tanh":
        return jnp.tanh(x)
    else:
        raise ValueError(f"Unsupported activation function: {name}")


def _policy_kernel(activations, action_dims, *refs):
    """Fused MLP forward on one batch tile.

    refs = (x_ref, W1, b1, ..., Wk, bk, W_head, b_head, out_ref)
    out columns [0, A)   -> action means
    out columns [A, 2A)  -> softplus of stddev logits      (single lane-dense slab)
    """
    n_hidden = len(activations)
    x_ref = refs[0]
    hidden_refs = refs[1 : 1 + 2 * n_hidden]
    w_head_ref = refs[1 + 2 * n_hidden]
    b_head_ref = refs[2 + 2 * n_hidden]
    out_ref = refs[-1]

    h = x_ref[...]
    if h.dtype != jnp.float32:
        h = h.astype(jnp.float32)  # mirrors x.float() in PyTorch

    for i, act in enumerate(activations):
        w = hidden_refs[2 * i][...]
        b = hidden_refs[2 * i + 1][...]
        h = _apply_activation(act, jnp.dot(h, w, preferred_element_type=jnp.float32) + b)

    # Single fused head matmul: [W_mean | W_std]  ->  (tile, 2*A) output slab.
    y = jnp.dot(h, w_head_ref[...], preferred_element_type=jnp.float32) + b_head_ref[...]

    # Numerically stable softplus == log(1 + exp(y)); keep it only on the std half
    # via a branch-free lane mask (no sub-tile slicing / re-concatenation).
    softplus = jnp.maximum(y, 0.0) + jnp.log1p(jnp.exp(-jnp.abs(y)))
    col = jax.lax.broadcasted_iota(jnp.int32, y.shape, dimension=1)
    out_ref[...] = jnp.where(col >= action_dims, softplus, y)


def policy_network_forward(x, params, activations, *, block_batch=512):
    """params = [(W1,b1), ..., (Wmean,bmean), (Wstd,bstd)] with W (in,out), b (1,out)."""
    n_hidden = len(activations)
    assert len(params) == n_hidden + 2
    batch, obs_dims = x.shape
    action_dims = params[-1][0].shape[1]

    # ---- Fuse the mean / stddev heads into one lane-packed matmul ----
    wm, bm = params[n_hidden]
    ws, bs = params[n_hidden + 1]
    w_head = jnp.concatenate([wm, ws], axis=1)   # (hidden, 2*A)
    b_head = jnp.concatenate([bm, bs], axis=1)   # (1, 2*A)

    flat_params = []
    for w, b in params[:n_hidden]:
        flat_params.append(w)
        flat_params.append(b)
    flat_params.append(w_head)
    flat_params.append(b_head)

    # ---- Batch grid: stream x / out in TB-row tiles, keep weights resident ----
    tb = min(block_batch, _round_up(batch, 8))
    padded = _round_up(batch, tb)
    if padded != batch:
        x = jnp.pad(x, ((0, padded - batch), (0, 0)))
    grid = (padded // tb,)

    batch_map = lambda i: (i, 0)
    const_map = lambda i: (0, 0)

    x_spec = pl.BlockSpec((tb, obs_dims), batch_map)
    param_specs = [pl.BlockSpec(p.shape, const_map) for p in flat_params]
    out_spec = pl.BlockSpec((tb, 2 * action_dims), batch_map)

    # ---- Advisory cost estimate for XLA's scheduler ----
    dims = [obs_dims] + [w.shape[1] for w, _ in params[:n_hidden]] + [2 * action_dims]
    flops = 2 * padded * sum(a * b for a, b in zip(dims[:-1], dims[1:]))
    transcendentals = padded * (
        sum(d for d, act in zip(dims[1:], activations) if act == "tanh")
        + 4 * action_dims  # exp + log1p on the std half
    )
    bytes_accessed = (
        padded * obs_dims * 4
        + sum(int(p.size) * p.dtype.itemsize for p in flat_params)
        + padded * 2 * action_dims * 4
    )

    kernel = functools.partial(_policy_kernel, tuple(activations), action_dims)

    out = pl.pallas_call(
        kernel,
        out_shape=jax.ShapeDtypeStruct((padded, 2 * action_dims), jnp.float32),
        grid_spec=pltpu.PrefetchScalarGridSpec(
            num_scalar_prefetch=0,
            grid=grid,
            in_specs=[x_spec] + param_specs,
            out_specs=out_spec,
        ),
        compiler_params=pltpu.CompilerParams(
            dimension_semantics=("parallel",),
            vmem_limit_bytes=32 * 1024 * 1024,
        ),
        cost_estimate=pl.CostEstimate(
            flops=int(flops),
            transcendentals=int(transcendentals),
            bytes_accessed=int(bytes_accessed),
        ),
    )(x, *flat_params)

    means = out[:batch, :action_dims]
    stddevs = out[:batch, action_dims:]
    return means, stddevs


def init_linear(key, in_dim, out_dim):
    """Deterministic init mimicking nn.Linear's default uniform(-1/sqrt(fan_in), 1/sqrt(fan_in))."""
    kw, kb = jax.random.split(key)
    bound = 1.0 / math.sqrt(in_dim)
    w = jax.random.uniform(kw, (in_dim, out_dim), jnp.float32, -bound, bound)
    b = jax.random.uniform(kb, (1, out_dim), jnp.float32, -bound, bound)
    return w, b


def build_policy_params(key, obs_dims, action_dims, hidden_layers):
    params = []
    in_dim = obs_dims
    for h in hidden_layers:
        key, sub = jax.random.split(key)
        params.append(init_linear(sub, in_dim, h))
        in_dim = h
    key, km = jax.random.split(key)
    params.append(init_linear(km, in_dim, action_dims))  # policy_mean_net
    key, ks = jax.random.split(key)
    params.append(init_linear(ks, in_dim, action_dims))  # policy_stddev_net
    return params


def reference_forward(x, params, activations):
    """Pure-JAX reference (exact expression from the PyTorch module)."""
    n_hidden = len(activations)
    h = x.astype(jnp.float32)
    for i, act in enumerate(activations):
        w, b = params[i]
        h = _apply_activation(act, h @ w + b)
    wm, bm = params[n_hidden]
    ws, bs = params[n_hidden + 1]
    mean = h @ wm + bm
    std = jnp.log(1.0 + jnp.exp(h @ ws + bs))
    return mean, std


if __name__ == "__main__":
    # InvertedPendulum-v2: obs_space_dims = 4, action_space_dims = 1
    obs_space_dims = 4
    action_space_dims = 1
    hidden_layers = [32, 32]
    activations = ["tanh", "relu"]

    key = jax.random.PRNGKey(0)
    key, pkey = jax.random.split(key)
    params = build_policy_params(pkey, obs_space_dims, action_space_dims, hidden_layers)

    # batch=8 exercises the single-tile path; batch=600 exercises batch-grid + padding.
    for batch in (8, 600):
        key, xkey = jax.random.split(key)
        x = jax.random.normal(xkey, (batch, obs_space_dims), jnp.float32)

        means, stddevs = policy_network_forward(x, params, activations, block_batch=256)
        means, stddevs = jax.block_until_ready((means, stddevs))

        ref_means, ref_stddevs = reference_forward(x, params, activations)
        assert means.shape == (batch, action_space_dims)
        assert stddevs.shape == (batch, action_space_dims)
        assert jnp.allclose(means, ref_means, atol=1e-5, rtol=1e-5)
        assert jnp.allclose(stddevs, ref_stddevs, atol=1e-5, rtol=1e-5)
        assert bool(jnp.all(stddevs > 0.0))

    print("KERNEL_OK")
</pallas_src>

<mosaic_0001>
module attributes {stable_mosaic.version = 11 : i64} {
  func.func @_policy_kernel(%arg0: i32, %arg1: memref<8x4xf32, #tpu.memory_space<vmem>>, %arg2: memref<4x32xf32, #tpu.memory_space<vmem>>, %arg3: memref<1x32xf32, #tpu.memory_space<vmem>>, %arg4: memref<32x32xf32, #tpu.memory_space<vmem>>, %arg5: memref<1x32xf32, #tpu.memory_space<vmem>>, %arg6: memref<32x2xf32, #tpu.memory_space<vmem>>, %arg7: memref<1x2xf32, #tpu.memory_space<vmem>>, %arg8: memref<8x2xf32, #tpu.memory_space<vmem>>) attributes {dimension_semantics = [#tpu.dimension_semantics<parallel>], iteration_bounds = array<i64: 1>, scalar_prefetch = 0 : i64, scratch_operands = 0 : i64, tpu.core_type = #tpu.core_type<tc>, window_params = [{transform_indices = @transform_0, window_bounds = array<i64: 8, 4>}, {pipeline_mode = #tpu.pipeline_mode<synchronous>, transform_indices = @transform_1, window_bounds = array<i64: 4, 32>}, {pipeline_mode = #tpu.pipeline_mode<synchronous>, transform_indices = @transform_2, window_bounds = array<i64: 1, 32>}, {pipeline_mode = #tpu.pipeline_mode<synchronous>, transform_indices = @transform_3, window_bounds = array<i64: 32, 32>}, {pipeline_mode = #tpu.pipeline_mode<synchronous>, transform_indices = @transform_4, window_bounds = array<i64: 1, 32>}, {pipeline_mode = #tpu.pipeline_mode<synchronous>, transform_indices = @transform_5, window_bounds = array<i64: 32, 2>}, {pipeline_mode = #tpu.pipeline_mode<synchronous>, transform_indices = @transform_6, window_bounds = array<i64: 1, 2>}, {transform_indices = @transform_7, window_bounds = array<i64: 8, 2>}]} {
    %c0 = arith.constant 0 : index
    %c0_0 = arith.constant 0 : index
    %0 = vector.load %arg1[%c0, %c0_0] : memref<8x4xf32, #tpu.memory_space<vmem>>, vector<8x4xf32>
    %c0_1 = arith.constant 0 : index
    %c0_2 = arith.constant 0 : index
    %1 = vector.load %arg2[%c0_1, %c0_2] : memref<4x32xf32, #tpu.memory_space<vmem>>, vector<4x32xf32>
    %c0_3 = arith.constant 0 : index
    %c0_4 = arith.constant 0 : index
    %2 = vector.load %arg3[%c0_3, %c0_4] : memref<1x32xf32, #tpu.memory_space<vmem>>, vector<1x32xf32>
    %cst = arith.constant dense<0.000000e+00> : vector<8x32xf32>
    %3 = tpu.matmul %0, %1, %cst {dimension_numbers = #tpu.dot_dimension_numbers<[1], [0], [0], [1], [0, 0, 1, 1], [], []>} : vector<8x4xf32>, vector<4x32xf32>, vector<8x32xf32> -> vector<8x32xf32>
    %4 = vector.broadcast %2 : vector<1x32xf32> to vector<8x32xf32>
    %5 = arith.addf %3, %4 : vector<8x32xf32>
    %6 = math.tanh %5 : vector<8x32xf32>
    %c0_5 = arith.constant 0 : index
    %c0_6 = arith.constant 0 : index
    %7 = vector.load %arg4[%c0_5, %c0_6] : memref<32x32xf32, #tpu.memory_space<vmem>>, vector<32x32xf32>
    %c0_7 = arith.constant 0 : index
    %c0_8 = arith.constant 0 : index
    %8 = vector.load %arg5[%c0_7, %c0_8] : memref<1x32xf32, #tpu.memory_space<vmem>>, vector<1x32xf32>
    %cst_9 = arith.constant dense<0.000000e+00> : vector<8x32xf32>
    %9 = tpu.matmul %6, %7, %cst_9 {dimension_numbers = #tpu.dot_dimension_numbers<[1], [0], [0], [1], [0, 0, 1, 1], [], []>} : vector<8x32xf32>, vector<32x32xf32>, vector<8x32xf32> -> vector<8x32xf32>
    %10 = vector.broadcast %8 : vector<1x32xf32> to vector<8x32xf32>
    %11 = arith.addf %9, %10 : vector<8x32xf32>
    %cst_10 = arith.constant 0.000000e+00 : f32
    %12 = vector.broadcast %cst_10 : f32 to vector<8x32xf32>
    %13 = arith.maximumf %11, %12 : vector<8x32xf32>
    %c0_11 = arith.constant 0 : index
    %c0_12 = arith.constant 0 : index
    %14 = vector.load %arg6[%c0_11, %c0_12] : memref<32x2xf32, #tpu.memory_space<vmem>>, vector<32x2xf32>
    %cst_13 = arith.constant dense<0.000000e+00> : vector<8x2xf32>
    %15 = tpu.matmul %13, %14, %cst_13 {dimension_numbers = #tpu.dot_dimension_numbers<[1], [0], [0], [1], [0, 0, 1, 1], [], []>} : vector<8x32xf32>, vector<32x2xf32>, vector<8x2xf32> -> vector<8x2xf32>
    %c0_14 = arith.constant 0 : index
    %c0_15 = arith.constant 0 : index
    %16 = vector.load %arg7[%c0_14, %c0_15] : memref<1x2xf32, #tpu.memory_space<vmem>>, vector<1x2xf32>
    %17 = vector.broadcast %16 : vector<1x2xf32> to vector<8x2xf32>
    %18 = arith.addf %15, %17 : vector<8x2xf32>
    %cst_16 = arith.constant 0.000000e+00 : f32
    %19 = vector.broadcast %cst_16 : f32 to vector<8x2xf32>
    %20 = arith.maximumf %18, %19 : vector<8x2xf32>
    %21 = math.absf %18 : vector<8x2xf32>
    %cst_17 = arith.constant 0.000000e+00 : f32
    %22 = vector.broadcast %cst_17 : f32 to vector<8x2xf32>
    %23 = arith.subf %22, %21 : vector<8x2xf32>
    %24 = math.exp %23 : vector<8x2xf32>
    %25 = math.log1p %24 : vector<8x2xf32>
    %26 = arith.addf %20, %25 : vector<8x2xf32>
    %27 = tpu.iota {dimensions = array<i32: 1>} : vector<8x2xi32>
    %c1_i32 = arith.constant 1 : i32
    %28 = vector.broadcast %c1_i32 : i32 to vector<8x2xi32>
    %29 = arith.cmpi sge, %27, %28 : vector<8x2xi32>
    %30 = arith.select %29, %26, %18 : vector<8x2xi1>, vector<8x2xf32>
    %c0_18 = arith.constant 0 : index
    %c0_19 = arith.constant 0 : index
    %31 = vector.load %arg8[%c0_18, %c0_19] : memref<8x2xf32, #tpu.memory_space<vmem>>, vector<8x2xf32>
    tpu.vector_store %arg8[%c0_18, %c0_19], %30 {strides = array<i32>} : memref<8x2xf32, #tpu.memory_space<vmem>>, vector<8x2xf32>,
    return
  }
  func.func @transform_0(%arg0: i32) -> (i32, i32) {
    %c0_i32 = arith.constant 0 : i32
    %c0_i32_0 = arith.constant 0 : i32
    return %arg0, %c0_i32 : i32, i32
  }
  func.func @transform_1(%arg0: i32) -> (i32, i32) {
    %c0_i32 = arith.constant 0 : i32
    %c0_i32_0 = arith.constant 0 : i32
    %c0_i32_1 = arith.constant 0 : i32
    return %c0_i32, %c0_i32_0 : i32, i32
  }
  func.func @transform_2(%arg0: i32) -> (i32, i32) {
    %c0_i32 = arith.constant 0 : i32
    %c0_i32_0 = arith.constant 0 : i32
    %c0_i32_1 = arith.constant 0 : i32
    return %c0_i32, %c0_i32_0 : i32, i32
  }
  func.func @transform_3(%arg0: i32) -> (i32, i32) {
    %c0_i32 = arith.constant 0 : i32
    %c0_i32_0 = arith.constant 0 : i32
    %c0_i32_1 = arith.constant 0 : i32
    return %c0_i32, %c0_i32_0 : i32, i32
  }
  func.func @transform_4(%arg0: i32) -> (i32, i32) {
    %c0_i32 = arith.constant 0 : i32
    %c0_i32_0 = arith.constant 0 : i32
    %c0_i32_1 = arith.constant 0 : i32
    return %c0_i32, %c0_i32_0 : i32, i32
  }
  func.func @transform_5(%arg0: i32) -> (i32, i32) {
    %c0_i32 = arith.constant 0 : i32
    %c0_i32_0 = arith.constant 0 : i32
    %c0_i32_1 = arith.constant 0 : i32
    return %c0_i32, %c0_i32_0 : i32, i32
  }
  func.func @transform_6(%arg0: i32) -> (i32, i32) {
    %c0_i32 = arith.constant 0 : i32
    %c0_i32_0 = arith.constant 0 : i32
    %c0_i32_1 = arith.constant 0 : i32
    return %c0_i32, %c0_i32_0 : i32, i32
  }
  func.func @transform_7(%arg0: i32) -> (i32, i32) {
    %c0_i32 = arith.constant 0 : i32
    %c0_i32_0 = arith.constant 0 : i32
    return %arg0, %c0_i32 : i32, i32
  }
}

</mosaic_0001>

<llo_original>
// kernel: tpu_custom_call.1
$region0: #{tpu_custom_call.1}
  #allocation0 [shape = 'u32[]', space=smem, size = 0x4, offset = 0x4, fixed_abs, tag = 'smem constant byte address 0x4 - core index']
  #allocation1 [shape = 'u32[72,128]{1,0:T(1,128)}', space=vmem, size = 0x9000, scoped, tag = 'internal scratch']
  %s0 = inlined_call_operand.vmem [shape: f32[8,4], index: 0, kind: input, shape index: {}]
  %s1 = inlined_call_operand.vmem [shape: f32[4,32], index: 1, kind: input, shape index: {}]
  %s2 = inlined_call_operand.vmem [shape: f32[1,32], index: 2, kind: input, shape index: {}]
  %s3 = inlined_call_operand.vmem [shape: f32[32,32], index: 3, kind: input, shape index: {}]
  %s4 = inlined_call_operand.vmem [shape: f32[1,32], index: 4, kind: input, shape index: {}]
  %s5 = inlined_call_operand.vmem [shape: f32[32,2], index: 5, kind: input, shape index: {}]
  %s6 = inlined_call_operand.vmem [shape: f32[1,2], index: 6, kind: input, shape index: {}]
  %s7 = inlined_call_operand.vmem [shape: f32[8,2], index: 7, kind: output, shape index: {}]
  %s8 = sld [smem:[#allocation0]]
  $region38: #{tpu_custom_call.1} parent=0
    _
  %s10 = ssub.s32 1, %s8
  %s11 = scalar_select 0, %s10, %s8
  // Predicated region
  $region2: #{tpu_custom_call.1} parent=0 // pred_check
    _
  $region3: #{tpu_custom_call.1} parent=0 // pred_check_branch
    %13 = sbr.rel (0) target = $region5
  $region4: #{tpu_custom_call.1} parent=0 // pred_region
    _
  $region5: #{tpu_custom_call.1} parent=0 // pred_fallthru
    _
  // Predicated region
  $region6: #{tpu_custom_call.1} parent=0 // pred_check
    _
  $region7: #{tpu_custom_call.1} parent=0 // pred_check_branch
    %15 = sbr.rel (0) target = $region9
  $region8: #{tpu_custom_call.1} parent=0 // pred_region
    _
  $region9: #{tpu_custom_call.1} parent=0 // pred_fallthru
    _
  // Predicated region
  $region10: #{tpu_custom_call.1} parent=0 // pred_check
    _
  $region11: #{tpu_custom_call.1} parent=0 // pred_check_branch
    %17 = sbr.rel (0) target = $region13
  $region12: #{tpu_custom_call.1} parent=0 // pred_region
    _
  $region13: #{tpu_custom_call.1} parent=0 // pred_fallthru
    _
  // Predicated region
  $region14: #{tpu_custom_call.1} parent=0 // pred_check
    _
  $region15: #{tpu_custom_call.1} parent=0 // pred_check_branch
    %19 = sbr.rel (0) target = $region17
  $region16: #{tpu_custom_call.1} parent=0 // pred_region
    _
  $region17: #{tpu_custom_call.1} parent=0 // pred_fallthru
    _
  // Predicated region
  $region18: #{tpu_custom_call.1} parent=0 // pred_check
    _
  $region19: #{tpu_custom_call.1} parent=0 // pred_check_branch
    %21 = sbr.rel (0) target = $region21
  $region20: #{tpu_custom_call.1} parent=0 // pred_region
    _
  $region21: #{tpu_custom_call.1} parent=0 // pred_fallthru
    _
  // Predicated region
  $region22: #{tpu_custom_call.1} parent=0 // pred_check
    _
  $region23: #{tpu_custom_call.1} parent=0 // pred_check_branch
    %23 = sbr.rel (0) target = $region25
  $region24: #{tpu_custom_call.1} parent=0 // pred_region
    _
  $region25: #{tpu_custom_call.1} parent=0 // pred_fallthru
    _
  // Predicated region
  $region26: #{tpu_custom_call.1} parent=0 // pred_check
    _
  $region27: #{tpu_custom_call.1} parent=0 // pred_check_branch
    %25 = sbr.rel (0) target = $region29
  $region28: #{tpu_custom_call.1} parent=0 // pred_region
    _
  $region29: #{tpu_custom_call.1} parent=0 // pred_fallthru
    _
  %v26 = vld [vmem:[%s0] sm:$0xff]
  %v27 = vld [vmem:[%s1] sm:$0xf]
  %v28 = vld [vmem:[%s2] sm:$0x1]
  %v30 = vperm.slane %v28, 0
  %vm32 = vcmask 31744
  %v34 = vsel %vm32, %v26, 0
  %vm36 = vcmask 1043456
  %v38 = vsel %vm36, %v27, 0
  %40 = vmatpush.msra.mxu0 0.0
  %41 = vmatpush.msra.mxu0 0.0
  %42 = vmatpush.msra.mxu0 0.0
  %43 = vmatpush.msra.mxu0 0.0
  %44 = vmatpush.msra.mxu0 0.0
  %45 = vmatpush.msra.mxu0 0.0
  %46 = vmatpush.msra.mxu0 0.0
  %47 = vmatpush.msra.mxu0 0.0
  %48 = vmatpush.msra.mxu0 0.0
  %49 = vmatpush.msra.mxu0 0.0
  %50 = vmatpush.msra.mxu0 0.0
  %51 = vmatpush.msra.mxu0 0.0
  %52 = vmatpush.msra.mxu0 0.0
  %53 = vmatpush.msra.mxu0 0.0
  %54 = vmatpush.msra.mxu0 0.0
  %55 = vmatpush.msra.mxu0 %v38
  %56 = vmatmul.f32.gmra.mxu0 %v34
  %v57 = vpop.f32.mrf.mxu0
  %v58 = vadd.f32 %v30, %v57
  %59 = vdwg.mxu0
  %v60 = vtanh.pop %v58
  %v61 = vld [vmem:[%s3] sm:$0xff]
  %v62 = vld [vmem:[%s3 + $0x8] sm:$0xff]
  %v63 = vld [vmem:[%s3 + $0x10] sm:$0xff]
  %v64 = vld [vmem:[%s3 + $0x18] sm:$0xff]
  %v65 = vld [vmem:[%s4] sm:$0x1]
  %v67 = vperm.slane %v65, 0
  %vm69 = vcmask 261120
  %v71 = vsel %vm69, %v60, 0
  %73 = vmatpush.msra.mxu0 0.0
  %74 = vmatpush.msra.mxu0 0.0
  %75 = vmatpush.msra.mxu0 0.0
  %76 = vmatpush.msra.mxu0 0.0
  %77 = vmatpush.msra.mxu0 0.0
  %78 = vmatpush.msra.mxu0 0.0
  %79 = vmatpush.msra.mxu0 0.0
  %80 = vmatpush.msra.mxu0 0.0
  %81 = vmatpush.msra.mxu0 0.0
  %82 = vmatpush.msra.mxu0 0.0
  %83 = vmatpush.msra.mxu0 0.0
  %84 = vmatpush.msra.mxu0 0.0
  %85 = vmatpush.msra.mxu0 %v64
  %86 = vmatpush.msra.mxu0 %v63
  %87 = vmatpush.msra.mxu0 %v62
  %88 = vmatpush.msra.mxu0 %v61
  %89 = vmatmul.f32.gmra.mxu0 %v71
  %v90 = vpop.f32.mrf.mxu0
  %v91 = vadd.f32 %v67, %v90
  %92 = vdwg.mxu0
  %v93 = vmax.f32 %v91, 0.0
  %v94 = vld [vmem:[%s5] sm:$0xff]
  %v95 = vld [vmem:[%s5 + $0x8] sm:$0xff]
  %v96 = vld [vmem:[%s5 + $0x10] sm:$0xff]
  %v97 = vld [vmem:[%s5 + $0x18] sm:$0xff]
  %v98 = vld [vmem:[%s6] sm:$0x1]
  %v100 = vperm.slane %v98, 0
  %v103 = vsel %vm69, %v93, 0
  %105 = vmatpush.msra.mxu0 0.0
  %106 = vmatpush.msra.mxu0 0.0
  %107 = vmatpush.msra.mxu0 0.0
  %108 = vmatpush.msra.mxu0 0.0
  %109 = vmatpush.msra.mxu0 0.0
  %110 = vmatpush.msra.mxu0 0.0
  %111 = vmatpush.msra.mxu0 0.0
  %112 = vmatpush.msra.mxu0 0.0
  %113 = vmatpush.msra.mxu0 0.0
  %114 = vmatpush.msra.mxu0 0.0
  %115 = vmatpush.msra.mxu0 0.0
  %116 = vmatpush.msra.mxu0 0.0
  %117 = vmatpush.msra.mxu0 %v97
  %118 = vmatpush.msra.mxu0 %v96
  %119 = vmatpush.msra.mxu0 %v95
  %120 = vmatpush.msra.mxu0 %v94
  %121 = vmatmul.f32.gmra.mxu0 %v103
  %v122 = vpop.f32.mrf.mxu0
  %v123 = vadd.f32 %v100, %v122
  %124 = vdwg.mxu0
  %v125 = vmax.f32 %v123, 0.0
  %v126 = vand.u32 2147483647, %v123
  %v127 = vsub.f32 0.0, %v126
  %v128 = vmul.f32 %v127, 1.442695
  %v129 = vpow.pop %v128
  %v130 = vadd.f32 %v129, 1.0
  %v131 = vlog2.pop %v130
  %v132 = vmul.f32 %v131, 0.6931472
  %v133 = vmul.f32 -0.5, %v129
  %v134 = vadd.f32 %v133, 1.0
  %v135 = vmul.f32 %v134, %v129
  %v136 = vand.u32 2147483647, %v129
  %vm137 = vcmp.lt.f32.partialorder %v136, 0.0004427343
  %v138 = vsel %vm137, %v135, %v132
  %v139 = vadd.f32 %v125, %v138
  %v140 = vlaneseq
  %v141 = vand.u32 %v140, 127
  %vm142 = vcmp.ge.s32.totalorder %v141, 1
  %v143 = vsel %vm142, %v139, %v123
  %vm144 = vcmask 15360
  %145 = vst.msk [vmem:[%s7] sm:$0xff] %vm144, %v143
  // Predicated region
  $region30: #{tpu_custom_call.1} parent=0 // pred_check
    _
  $region31: #{tpu_custom_call.1} parent=0 // pred_check_branch
    %147 = sbr.rel (0) target = $region33
  $region32: #{tpu_custom_call.1} parent=0 // pred_region
    _
  $region33: #{tpu_custom_call.1} parent=0 // pred_fallthru
    _
  // Predicated region
  $region34: #{tpu_custom_call.1} parent=0 // pred_check
    _
  $region35: #{tpu_custom_call.1} parent=0 // pred_check_branch
    %149 = sbr.rel (0) target = $region37
  $region36: #{tpu_custom_call.1} parent=0 // pred_region
    _
  $region37: #{tpu_custom_call.1} parent=0 // pred_fallthru
    _

</llo_original>
